<compile_context>
chip_gen: v5e
topology: v5e:2x2
jax: 0.10.0
libtpu: 0.0.40
codegen_flags: <defaults>
</compile_context>

<pallas_src>
import functools

import jax
import jax.numpy as jnp
import numpy as np
from jax import lax
from jax.experimental import pallas as pl
from jax.experimental.pallas import tpu as pltpu


def _round_up(x, m):
    return (x + m - 1) // m * m


def _lstm_q_kernel(obs_ref, wih_ref, whh_ref, b_ref, wh_ref, bh_ref, h0_ref, c0_ref,
                   q_ref, hN_ref, cN_ref,
                   xp_ref, hseq_ref,
                   *, seq_len, batch_p, hidden):
    T, Bp, H = seq_len, batch_p, hidden
    G = 4 * H                                      # packed gate width ([i|f|o|g])

    # ---- Prologue: input projection for ALL time steps in one MXU matmul (no recurrence). ----
    # obs_ref is (T*Bp, D); result (T*Bp, 4H) with the folded bias (b_ih + b_hh) already added.
    xp_ref[...] = (jnp.dot(obs_ref[...], wih_ref[...], preferred_element_type=jnp.float32)
                   + b_ref[...])

    # Per-lane pre-scale so that ONE tanh covers all four gates:
    #   sigmoid lanes [0, 3H): tanh(0.5*x) -> sigmoid(x) = 0.5*(tanh(0.5*x)+1)
    #   tanh lanes    [3H,4H): tanh(x)
    lane = lax.broadcasted_iota(jnp.int32, (1, G), 1)
    gate_scale = jnp.broadcast_to(jnp.where(lane < 3 * H, 0.5, 1.0), (Bp, G))  # hoisted

    # ---- Sequential LSTM recurrence; h/c carried in vregs, unroll capped. ----
    def step(t, carry):
        h, c = carry                               # (Bp, H) each
        row = pl.multiple_of(t * Bp, Bp)           # tile-aligned sublane offset
        gates = (xp_ref[pl.ds(row, Bp), :]
                 + jnp.dot(h, whh_ref[...], preferred_element_type=jnp.float32))  # (Bp, 4H)
        t_all = jnp.tanh(gates * gate_scale)       # single EUP push for all gates
        i = 0.5 * (t_all[:, 0 * H:1 * H] + 1.0)
        f = 0.5 * (t_all[:, 1 * H:2 * H] + 1.0)
        o = 0.5 * (t_all[:, 2 * H:3 * H] + 1.0)
        g = t_all[:, 3 * H:4 * H]
        c_new = f * c + i * g
        h_new = o * jnp.tanh(c_new)
        # Stash h_t for the hoisted Q head (sublane-aligned store).
        hseq_ref[pl.ds(row, Bp), :] = h_new
        return h_new, c_new

    h_fin, c_fin = lax.fori_loop(0, T, step, (h0_ref[...], c0_ref[...]),
                                 unroll=min(8, T))

    hN_ref[...] = h_fin
    cN_ref[...] = c_fin

    # ---- Epilogue: one lane-dense head matmul over the whole h sequence.  The dueling
    # combination is already folded into wh_ref / bh_ref by the wrapper. ----
    q_ref[...] = (jnp.dot(hseq_ref[...], wh_ref[...], preferred_element_type=jnp.float32)
                  + bh_ref[...]).astype(q_ref.dtype)


def lstm_net_forward(obs, hidden, params, *, deuling=False):
    """Pallas implementation of LSTMNet.forward.

    obs:    (T, B, D) float32
    hidden: (h0, c0), each (1, B, H) float32
    returns (Q, (hN, cN)) with Q: (T, B, A)
    """
    h0, c0 = hidden
    T, B, D = obs.shape
    H = params["w_hh"].shape[1]
    A = params["w_q"].shape[0]

    f32 = jnp.float32
    Bp = _round_up(B, 8)                         # sublane-align the batch
    Ap = _round_up(A, 128)                       # lane-dense head / output width
    G = 4 * H                                    # packed gate width (=128 for H=32)

    def reorder_gates(w_t):                      # columns [i|f|g|o] (PyTorch) -> [i|f|o|g]
        gi, gf, gg, go = jnp.split(w_t, 4, axis=1)
        return jnp.concatenate([gi, gf, go, gg], axis=1)

    # LSTM weights: pre-transposed, gate columns packed & reordered, the two biases folded.
    w_ih_p = reorder_gates(params["w_ih"].T.astype(f32))                      # (D, 4H)
    w_hh_p = reorder_gates(params["w_hh"].T.astype(f32))                      # (H, 4H)
    b_p = reorder_gates((params["b_ih"] + params["b_hh"]).astype(f32)[None, :])  # (1, 4H)

    # Head weights with the dueling correction (linear in h) folded in:
    #   Q' = h @ Wq^T + bq + (h @ wv^T + bv) - mean_a(h @ Wq^T + bq)
    wq_t = params["w_q"].T.astype(f32)                                        # (H, A)
    bq = params["b_q"].astype(f32)                                            # (A,)
    if deuling:
        w_head = wq_t - jnp.mean(wq_t, axis=1, keepdims=True) + params["w_v"].T.astype(f32)
        b_head = bq - jnp.mean(bq) + params["b_v"].astype(f32)
    else:
        w_head = wq_t
        b_head = bq
    w_head_p = jnp.pad(w_head, ((0, 0), (0, Ap - A)))                         # (H, Ap)
    b_head_p = jnp.pad(b_head[None, :], ((0, 0), (0, Ap - A)))                # (1, Ap)

    # Activations / state: batch padded to Bp, time flattened; h/c stay H lanes wide.
    obs_p = jnp.pad(obs.astype(f32), ((0, 0), (0, Bp - B), (0, 0))).reshape(T * Bp, D)
    h0_p = jnp.pad(h0[0].astype(f32), ((0, Bp - B), (0, 0)))                  # (Bp, H)
    c0_p = jnp.pad(c0[0].astype(f32), ((0, Bp - B), (0, 0)))                  # (Bp, H)

    kernel = functools.partial(_lstm_q_kernel, seq_len=T, batch_p=Bp, hidden=H)

    # Explicit VMEM budget derived from the resident buffers (2x for pipelining headroom),
    # clamped well under the 64 MiB v7x physical VMEM.
    resident = (T * Bp * D + D * G + H * G + G + H * Ap + Ap + 2 * Bp * H      # inputs
                + T * Bp * Ap + 2 * Bp * H)                                    # outputs
    scratch = T * Bp * G + T * Bp * H
    vmem_limit = int(min(max(4 * (2 * resident + scratch) + (8 << 20), 32 << 20), 56 << 20))

    q_p, hN_p, cN_p = pl.pallas_call(
        kernel,
        out_shape=(
            jax.ShapeDtypeStruct((T * Bp, Ap), f32),
            jax.ShapeDtypeStruct((Bp, H), f32),
            jax.ShapeDtypeStruct((Bp, H), f32),
        ),
        grid_spec=pltpu.PrefetchScalarGridSpec(
            num_scalar_prefetch=0,
            grid=(1,),
            in_specs=[
                pl.BlockSpec((T * Bp, D), lambda i: (0, 0)),        # obs (time-flattened)
                pl.BlockSpec((D, G), lambda i: (0, 0)),             # W_ih^T (packed gates)
                pl.BlockSpec((H, G), lambda i: (0, 0)),             # W_hh^T (packed gates)
                pl.BlockSpec((1, G), lambda i: (0, 0)),             # b_ih + b_hh
                pl.BlockSpec((H, Ap), lambda i: (0, 0)),            # fused / dueling-folded head
                pl.BlockSpec((1, Ap), lambda i: (0, 0)),            # head bias
                pl.BlockSpec((Bp, H), lambda i: (0, 0)),            # h0
                pl.BlockSpec((Bp, H), lambda i: (0, 0)),            # c0
            ],
            out_specs=[
                pl.BlockSpec((T * Bp, Ap), lambda i: (0, 0)),       # Q (lane-dense slab)
                pl.BlockSpec((Bp, H), lambda i: (0, 0)),            # hN
                pl.BlockSpec((Bp, H), lambda i: (0, 0)),            # cN
            ],
            scratch_shapes=[
                pltpu.VMEM((T * Bp, G), jnp.float32),               # hoisted input projection
                pltpu.VMEM((T * Bp, H), jnp.float32),               # h_t sequence for the head
            ],
        ),
        compiler_params=pltpu.CompilerParams(
            dimension_semantics=("arbitrary",),
            vmem_limit_bytes=vmem_limit,
        ),
    )(obs_p, w_ih_p, w_hh_p, b_p, w_head_p, b_head_p, h0_p, c0_p)

    q = q_p.reshape(T, Bp, Ap)[:, :B, :A]
    hN = hN_p[:B, :][None]
    cN = cN_p[:B, :][None]
    return q, (hN, cN)


def lstm_net_reference(obs, hidden, params, *, deuling=False):
    """Pure-JAX reference mirroring PyTorch nn.LSTM + nn.Linear semantics."""
    h0, c0 = hidden
    w_ih, w_hh = params["w_ih"], params["w_hh"]
    b_ih, b_hh = params["b_ih"], params["b_hh"]
    H = w_hh.shape[1]

    def step(carry, x_t):
        h, c = carry
        gates = x_t @ w_ih.T + b_ih + h @ w_hh.T + b_hh
        i = jax.nn.sigmoid(gates[:, 0 * H:1 * H])
        f = jax.nn.sigmoid(gates[:, 1 * H:2 * H])
        g = jnp.tanh(gates[:, 2 * H:3 * H])
        o = jax.nn.sigmoid(gates[:, 3 * H:4 * H])
        c = f * c + i * g
        h = o * jnp.tanh(c)
        return (h, c), h

    (hN, cN), outs = jax.lax.scan(step, (h0[0], c0[0]), obs)
    Q = outs @ params["w_q"].T + params["b_q"]
    if deuling:
        V = outs @ params["w_v"].T + params["b_v"]
        Q = Q + V - Q.mean(axis=2, keepdims=True)
    return Q, (hN[None], cN[None])


def init_params(key, input_size, hidden_size, num_actions):
    """Deterministic init mimicking PyTorch defaults (uniform +- 1/sqrt(fan))."""
    ks = jax.random.split(key, 8)
    k_lstm = 1.0 / np.sqrt(hidden_size)
    k_lin = 1.0 / np.sqrt(hidden_size)
    u = lambda k, shape, bound: jax.random.uniform(k, shape, jnp.float32, -bound, bound)
    return {
        "w_ih": u(ks[0], (4 * hidden_size, input_size), k_lstm),
        "w_hh": u(ks[1], (4 * hidden_size, hidden_size), k_lstm),
        "b_ih": u(ks[2], (4 * hidden_size,), k_lstm),
        "b_hh": u(ks[3], (4 * hidden_size,), k_lstm),
        "w_q": u(ks[4], (num_actions, hidden_size), k_lin),
        "b_q": u(ks[5], (num_actions,), k_lin),
        "w_v": u(ks[6], (1, hidden_size), k_lin),
        "b_v": u(ks[7], (1,), k_lin),
    }


if __name__ == "__main__":
    # observation_space.shape = (4, 4) -> input_size = 16; action_space.n = 4
    T, B, D, H, A = 8, 2, 16, 32, 4

    key = jax.random.PRNGKey(0)
    k_obs, k_p = jax.random.split(key)
    obs = jax.random.normal(k_obs, (T, B, D), dtype=jnp.float32)
    h0 = jnp.zeros((1, B, H), dtype=jnp.float32)   # get_h0()
    c0 = jnp.zeros((1, B, H), dtype=jnp.float32)
    params = init_params(k_p, D, H, A)

    for deuling in (False, True):   # default LSTMNet uses deuling=False
        q, (hN, cN) = lstm_net_forward(obs, (h0, c0), params, deuling=deuling)
        jax.block_until_ready((q, hN, cN))
        q_ref, (hN_ref, cN_ref) = lstm_net_reference(obs, (h0, c0), params, deuling=deuling)
        np.testing.assert_allclose(np.asarray(q), np.asarray(q_ref), rtol=1e-5, atol=1e-5)
        np.testing.assert_allclose(np.asarray(hN), np.asarray(hN_ref), rtol=1e-5, atol=1e-5)
        np.testing.assert_allclose(np.asarray(cN), np.asarray(cN_ref), rtol=1e-5, atol=1e-5)

    print("KERNEL_OK")
</pallas_src>

<mosaic_0001>
module attributes {stable_mosaic.version = 11 : i64} {
  func.func @_lstm_q_kernel(%arg0: i32, %arg1: memref<64x16xf32, #tpu.memory_space<vmem>>, %arg2: memref<16x128xf32, #tpu.memory_space<vmem>>, %arg3: memref<32x128xf32, #tpu.memory_space<vmem>>, %arg4: memref<1x128xf32, #tpu.memory_space<vmem>>, %arg5: memref<32x128xf32, #tpu.memory_space<vmem>>, %arg6: memref<1x128xf32, #tpu.memory_space<vmem>>, %arg7: memref<8x32xf32, #tpu.memory_space<vmem>>, %arg8: memref<8x32xf32, #tpu.memory_space<vmem>>, %arg9: memref<64x128xf32, #tpu.memory_space<vmem>>, %arg10: memref<8x32xf32, #tpu.memory_space<vmem>>, %arg11: memref<8x32xf32, #tpu.memory_space<vmem>>, %arg12: memref<64x128xf32, #tpu.memory_space<vmem>>, %arg13: memref<64x32xf32, #tpu.memory_space<vmem>>) attributes {dimension_semantics = [#tpu.dimension_semantics<arbitrary>], iteration_bounds = array<i64: 1>, scalar_prefetch = 0 : i64, scratch_operands = 2 : i64, tpu.core_type = #tpu.core_type<tc>, window_params = [{pipeline_mode = #tpu.pipeline_mode<synchronous>, transform_indices = @transform_0, window_bounds = array<i64: 64, 16>}, {pipeline_mode = #tpu.pipeline_mode<synchronous>, transform_indices = @transform_1, window_bounds = array<i64: 16, 128>}, {pipeline_mode = #tpu.pipeline_mode<synchronous>, transform_indices = @transform_2, window_bounds = array<i64: 32, 128>}, {pipeline_mode = #tpu.pipeline_mode<synchronous>, transform_indices = @transform_3, window_bounds = array<i64: 1, 128>}, {pipeline_mode = #tpu.pipeline_mode<synchronous>, transform_indices = @transform_4, window_bounds = array<i64: 32, 128>}, {pipeline_mode = #tpu.pipeline_mode<synchronous>, transform_indices = @transform_5, window_bounds = array<i64: 1, 128>}, {pipeline_mode = #tpu.pipeline_mode<synchronous>, transform_indices = @transform_6, window_bounds = array<i64: 8, 32>}, {pipeline_mode = #tpu.pipeline_mode<synchronous>, transform_indices = @transform_7, window_bounds = array<i64: 8, 32>}, {pipeline_mode = #tpu.pipeline_mode<synchronous>, transform_indices = @transform_8, window_bounds = array<i64: 64, 128>}, {pipeline_mode = #tpu.pipeline_mode<synchronous>, transform_indices = @transform_9, window_bounds = array<i64: 8, 32>}, {pipeline_mode = #tpu.pipeline_mode<synchronous>, transform_indices = @transform_10, window_bounds = array<i64: 8, 32>}]} {
    %c0 = arith.constant 0 : index
    %c0_0 = arith.constant 0 : index
    %0 = vector.load %arg1[%c0, %c0_0] : memref<64x16xf32, #tpu.memory_space<vmem>>, vector<64x16xf32>
    %c0_1 = arith.constant 0 : index
    %c0_2 = arith.constant 0 : index
    %1 = vector.load %arg2[%c0_1, %c0_2] : memref<16x128xf32, #tpu.memory_space<vmem>>, vector<16x128xf32>
    %cst = arith.constant dense<0.000000e+00> : vector<64x128xf32>
    %2 = tpu.matmul %0, %1, %cst {dimension_numbers = #tpu.dot_dimension_numbers<[1], [0], [0], [1], [0, 0, 1, 1], [], []>} : vector<64x16xf32>, vector<16x128xf32>, vector<64x128xf32> -> vector<64x128xf32>
    %c0_3 = arith.constant 0 : index
    %c0_4 = arith.constant 0 : index
    %3 = vector.load %arg4[%c0_3, %c0_4] : memref<1x128xf32, #tpu.memory_space<vmem>>, vector<1x128xf32>
    %4 = vector.broadcast %3 : vector<1x128xf32> to vector<64x128xf32>
    %5 = arith.addf %2, %4 : vector<64x128xf32>
    %c0_5 = arith.constant 0 : index
    %c0_6 = arith.constant 0 : index
    %6 = vector.load %arg12[%c0_5, %c0_6] : memref<64x128xf32, #tpu.memory_space<vmem>>, vector<64x128xf32>
    tpu.vector_store %arg12[%c0_5, %c0_6], %5 {strides = array<i32>} : memref<64x128xf32, #tpu.memory_space<vmem>>, vector<64x128xf32>,
    %7 = tpu.iota {dimensions = array<i32: 1>} : vector<1x128xi32>
    %c96_i32 = arith.constant 96 : i32
    %8 = vector.broadcast %c96_i32 : i32 to vector<1x128xi32>
    %9 = arith.cmpi slt, %7, %8 : vector<1x128xi32>
    %cst_7 = arith.constant 5.000000e-01 : f32
    %cst_8 = arith.constant 1.000000e+00 : f32
    %10 = vector.broadcast %cst_7 : f32 to vector<1x128xf32>
    %11 = vector.broadcast %cst_8 : f32 to vector<1x128xf32>
    %12 = arith.select %9, %10, %11 : vector<1x128xi1>, vector<1x128xf32>
    %13 = vector.shape_cast %12 : vector<1x128xf32> to vector<1x128xf32>
    %14 = vector.broadcast %13 : vector<1x128xf32> to vector<8x128xf32>
    %c0_9 = arith.constant 0 : index
    %c0_10 = arith.constant 0 : index
    %15 = vector.load %arg7[%c0_9, %c0_10] : memref<8x32xf32, #tpu.memory_space<vmem>>, vector<8x32xf32>
    %c0_11 = arith.constant 0 : index
    %c0_12 = arith.constant 0 : index
    %16 = vector.load %arg8[%c0_11, %c0_12] : memref<8x32xf32, #tpu.memory_space<vmem>>, vector<8x32xf32>
    %c0_i32 = arith.constant 0 : i32
    %c8_i32 = arith.constant 8 : i32
    %17 = arith.muli %c0_i32, %c8_i32 : i32
    %18 = tpu.assume_multiple %17, 8 : i32
    %19 = arith.index_cast %18 : i32 to index
    %c0_13 = arith.constant 0 : index
    %20 = vector.load %arg12[%19, %c0_13] : memref<64x128xf32, #tpu.memory_space<vmem>>, vector<8x128xf32>
    %c0_14 = arith.constant 0 : index
    %c0_15 = arith.constant 0 : index
    %21 = vector.load %arg3[%c0_14, %c0_15] : memref<32x128xf32, #tpu.memory_space<vmem>>, vector<32x128xf32>
    %cst_16 = arith.constant dense<0.000000e+00> : vector<8x128xf32>
    %22 = tpu.matmul %15, %21, %cst_16 {dimension_numbers = #tpu.dot_dimension_numbers<[1], [0], [0], [1], [0, 0, 1, 1], [], []>} : vector<8x32xf32>, vector<32x128xf32>, vector<8x128xf32> -> vector<8x128xf32>
    %23 = arith.addf %20, %22 : vector<8x128xf32>
    %24 = arith.mulf %23, %14 : vector<8x128xf32>
    %25 = math.tanh %24 : vector<8x128xf32>
    %26 = vector.extract_strided_slice %25 {offsets = [0, 0], sizes = [8, 32], strides = [1, 1]} : vector<8x128xf32> to vector<8x32xf32>
    %cst_17 = arith.constant 1.000000e+00 : f32
    %27 = vector.broadcast %cst_17 : f32 to vector<8x32xf32>
    %28 = arith.addf %26, %27 : vector<8x32xf32>
    %cst_18 = arith.constant 5.000000e-01 : f32
    %29 = vector.broadcast %cst_18 : f32 to vector<8x32xf32>
    %30 = arith.mulf %29, %28 : vector<8x32xf32>
    %31 = vector.extract_strided_slice %25 {offsets = [0, 32], sizes = [8, 32], strides = [1, 1]} : vector<8x128xf32> to vector<8x32xf32>
    %cst_19 = arith.constant 1.000000e+00 : f32
    %32 = vector.broadcast %cst_19 : f32 to vector<8x32xf32>
    %33 = arith.addf %31, %32 : vector<8x32xf32>
    %cst_20 = arith.constant 5.000000e-01 : f32
    %34 = vector.broadcast %cst_20 : f32 to vector<8x32xf32>
    %35 = arith.mulf %34, %33 : vector<8x32xf32>
    %36 = vector.extract_strided_slice %25 {offsets = [0, 64], sizes = [8, 32], strides = [1, 1]} : vector<8x128xf32> to vector<8x32xf32>
    %cst_21 = arith.constant 1.000000e+00 : f32
    %37 = vector.broadcast %cst_21 : f32 to vector<8x32xf32>
    %38 = arith.addf %36, %37 : vector<8x32xf32>
    %cst_22 = arith.constant 5.000000e-01 : f32
    %39 = vector.broadcast %cst_22 : f32 to vector<8x32xf32>
    %40 = arith.mulf %39, %38 : vector<8x32xf32>
    %41 = vector.extract_strided_slice %25 {offsets = [0, 96], sizes = [8, 32], strides = [1, 1]} : vector<8x128xf32> to vector<8x32xf32>
    %42 = arith.mulf %35, %16 : vector<8x32xf32>
    %43 = arith.mulf %30, %41 : vector<8x32xf32>
    %44 = arith.addf %42, %43 : vector<8x32xf32>
    %45 = math.tanh %44 : vector<8x32xf32>
    %46 = arith.mulf %40, %45 : vector<8x32xf32>
    %47 = arith.index_cast %18 : i32 to index
    %c0_23 = arith.constant 0 : index
    %48 = vector.load %arg13[%47, %c0_23] : memref<64x32xf32, #tpu.memory_space<vmem>>, vector<8x32xf32>
    tpu.vector_store %arg13[%47, %c0_23], %46 {strides = array<i32>} : memref<64x32xf32, #tpu.memory_space<vmem>>, vector<8x32xf32>,
    %c1_i32 = arith.constant 1 : i32
    %c8_i32_24 = arith.constant 8 : i32
    %49 = arith.muli %c1_i32, %c8_i32_24 : i32
    %50 = tpu.assume_multiple %49, 8 : i32
    %51 = arith.index_cast %50 : i32 to index
    %c0_25 = arith.constant 0 : index
    %52 = vector.load %arg12[%51, %c0_25] : memref<64x128xf32, #tpu.memory_space<vmem>>, vector<8x128xf32>
    %c0_26 = arith.constant 0 : index
    %c0_27 = arith.constant 0 : index
    %53 = vector.load %arg3[%c0_26, %c0_27] : memref<32x128xf32, #tpu.memory_space<vmem>>, vector<32x128xf32>
    %cst_28 = arith.constant dense<0.000000e+00> : vector<8x128xf32>
    %54 = tpu.matmul %46, %53, %cst_28 {dimension_numbers = #tpu.dot_dimension_numbers<[1], [0], [0], [1], [0, 0, 1, 1], [], []>} : vector<8x32xf32>, vector<32x128xf32>, vector<8x128xf32> -> vector<8x128xf32>
    %55 = arith.addf %52, %54 : vector<8x128xf32>
    %56 = arith.mulf %55, %14 : vector<8x128xf32>
    %57 = math.tanh %56 : vector<8x128xf32>
    %58 = vector.extract_strided_slice %57 {offsets = [0, 0], sizes = [8, 32], strides = [1, 1]} : vector<8x128xf32> to vector<8x32xf32>
    %cst_29 = arith.constant 1.000000e+00 : f32
    %59 = vector.broadcast %cst_29 : f32 to vector<8x32xf32>
    %60 = arith.addf %58, %59 : vector<8x32xf32>
    %cst_30 = arith.constant 5.000000e-01 : f32
    %61 = vector.broadcast %cst_30 : f32 to vector<8x32xf32>
    %62 = arith.mulf %61, %60 : vector<8x32xf32>
    %63 = vector.extract_strided_slice %57 {offsets = [0, 32], sizes = [8, 32], strides = [1, 1]} : vector<8x128xf32> to vector<8x32xf32>
    %cst_31 = arith.constant 1.000000e+00 : f32
    %64 = vector.broadcast %cst_31 : f32 to vector<8x32xf32>
    %65 = arith.addf %63, %64 : vector<8x32xf32>
    %cst_32 = arith.constant 5.000000e-01 : f32
    %66 = vector.broadcast %cst_32 : f32 to vector<8x32xf32>
    %67 = arith.mulf %66, %65 : vector<8x32xf32>
    %68 = vector.extract_strided_slice %57 {offsets = [0, 64], sizes = [8, 32], strides = [1, 1]} : vector<8x128xf32> to vector<8x32xf32>
    %cst_33 = arith.constant 1.000000e+00 : f32
    %69 = vector.broadcast %cst_33 : f32 to vector<8x32xf32>
    %70 = arith.addf %68, %69 : vector<8x32xf32>
    %cst_34 = arith.constant 5.000000e-01 : f32
    %71 = vector.broadcast %cst_34 : f32 to vector<8x32xf32>
    %72 = arith.mulf %71, %70 : vector<8x32xf32>
    %73 = vector.extract_strided_slice %57 {offsets = [0, 96], sizes = [8, 32], strides = [1, 1]} : vector<8x128xf32> to vector<8x32xf32>
    %74 = arith.mulf %67, %44 : vector<8x32xf32>
    %75 = arith.mulf %62, %73 : vector<8x32xf32>
    %76 = arith.addf %74, %75 : vector<8x32xf32>
    %77 = math.tanh %76 : vector<8x32xf32>
    %78 = arith.mulf %72, %77 : vector<8x32xf32>
    %79 = arith.index_cast %50 : i32 to index
    %c0_35 = arith.constant 0 : index
    %80 = vector.load %arg13[%79, %c0_35] : memref<64x32xf32, #tpu.memory_space<vmem>>, vector<8x32xf32>
    tpu.vector_store %arg13[%79, %c0_35], %78 {strides = array<i32>} : memref<64x32xf32, #tpu.memory_space<vmem>>, vector<8x32xf32>,
    %c2_i32 = arith.constant 2 : i32
    %c8_i32_36 = arith.constant 8 : i32
    %81 = arith.muli %c2_i32, %c8_i32_36 : i32
    %82 = tpu.assume_multiple %81, 8 : i32
    %83 = arith.index_cast %82 : i32 to index
    %c0_37 = arith.constant 0 : index
    %84 = vector.load %arg12[%83, %c0_37] : memref<64x128xf32, #tpu.memory_space<vmem>>, vector<8x128xf32>
    %c0_38 = arith.constant 0 : index
    %c0_39 = arith.constant 0 : index
    %85 = vector.load %arg3[%c0_38, %c0_39] : memref<32x128xf32, #tpu.memory_space<vmem>>, vector<32x128xf32>
    %cst_40 = arith.constant dense<0.000000e+00> : vector<8x128xf32>
    %86 = tpu.matmul %78, %85, %cst_40 {dimension_numbers = #tpu.dot_dimension_numbers<[1], [0], [0], [1], [0, 0, 1, 1], [], []>} : vector<8x32xf32>, vector<32x128xf32>, vector<8x128xf32> -> vector<8x128xf32>
    %87 = arith.addf %84, %86 : vector<8x128xf32>
    %88 = arith.mulf %87, %14 : vector<8x128xf32>
    %89 = math.tanh %88 : vector<8x128xf32>
    %90 = vector.extract_strided_slice %89 {offsets = [0, 0], sizes = [8, 32], strides = [1, 1]} : vector<8x128xf32> to vector<8x32xf32>
    %cst_41 = arith.constant 1.000000e+00 : f32
    %91 = vector.broadcast %cst_41 : f32 to vector<8x32xf32>
    %92 = arith.addf %90, %91 : vector<8x32xf32>
    %cst_42 = arith.constant 5.000000e-01 : f32
    %93 = vector.broadcast %cst_42 : f32 to vector<8x32xf32>
    %94 = arith.mulf %93, %92 : vector<8x32xf32>
    %95 = vector.extract_strided_slice %89 {offsets = [0, 32], sizes = [8, 32], strides = [1, 1]} : vector<8x128xf32> to vector<8x32xf32>
    %cst_43 = arith.constant 1.000000e+00 : f32
    %96 = vector.broadcast %cst_43 : f32 to vector<8x32xf32>
    %97 = arith.addf %95, %96 : vector<8x32xf32>
    %cst_44 = arith.constant 5.000000e-01 : f32
    %98 = vector.broadcast %cst_44 : f32 to vector<8x32xf32>
    %99 = arith.mulf %98, %97 : vector<8x32xf32>
    %100 = vector.extract_strided_slice %89 {offsets = [0, 64], sizes = [8, 32], strides = [1, 1]} : vector<8x128xf32> to vector<8x32xf32>
    %cst_45 = arith.constant 1.000000e+00 : f32
    %101 = vector.broadcast %cst_45 : f32 to vector<8x32xf32>
    %102 = arith.addf %100, %101 : vector<8x32xf32>
    %cst_46 = arith.constant 5.000000e-01 : f32
    %103 = vector.broadcast %cst_46 : f32 to vector<8x32xf32>
    %104 = arith.mulf %103, %102 : vector<8x32xf32>
    %105 = vector.extract_strided_slice %89 {offsets = [0, 96], sizes = [8, 32], strides = [1, 1]} : vector<8x128xf32> to vector<8x32xf32>
    %106 = arith.mulf %99, %76 : vector<8x32xf32>
    %107 = arith.mulf %94, %105 : vector<8x32xf32>
    %108 = arith.addf %106, %107 : vector<8x32xf32>
    %109 = math.tanh %108 : vector<8x32xf32>
    %110 = arith.mulf %104, %109 : vector<8x32xf32>
    %111 = arith.index_cast %82 : i32 to index
    %c0_47 = arith.constant 0 : index
    %112 = vector.load %arg13[%111, %c0_47] : memref<64x32xf32, #tpu.memory_space<vmem>>, vector<8x32xf32>
    tpu.vector_store %arg13[%111, %c0_47], %110 {strides = array<i32>} : memref<64x32xf32, #tpu.memory_space<vmem>>, vector<8x32xf32>,
    %c3_i32 = arith.constant 3 : i32
    %c8_i32_48 = arith.constant 8 : i32
    %113 = arith.muli %c3_i32, %c8_i32_48 : i32
    %114 = tpu.assume_multiple %113, 8 : i32
    %115 = arith.index_cast %114 : i32 to index
    %c0_49 = arith.constant 0 : index
    %116 = vector.load %arg12[%115, %c0_49] : memref<64x128xf32, #tpu.memory_space<vmem>>, vector<8x128xf32>
    %c0_50 = arith.constant 0 : index
    %c0_51 = arith.constant 0 : index
    %117 = vector.load %arg3[%c0_50, %c0_51] : memref<32x128xf32, #tpu.memory_space<vmem>>, vector<32x128xf32>
    %cst_52 = arith.constant dense<0.000000e+00> : vector<8x128xf32>
    %118 = tpu.matmul %110, %117, %cst_52 {dimension_numbers = #tpu.dot_dimension_numbers<[1], [0], [0], [1], [0, 0, 1, 1], [], []>} : vector<8x32xf32>, vector<32x128xf32>, vector<8x128xf32> -> vector<8x128xf32>
    %119 = arith.addf %116, %118 : vector<8x128xf32>
    %120 = arith.mulf %119, %14 : vector<8x128xf32>
    %121 = math.tanh %120 : vector<8x128xf32>
    %122 = vector.extract_strided_slice %121 {offsets = [0, 0], sizes = [8, 32], strides = [1, 1]} : vector<8x128xf32> to vector<8x32xf32>
    %cst_53 = arith.constant 1.000000e+00 : f32
    %123 = vector.broadcast %cst_53 : f32 to vector<8x32xf32>
    %124 = arith.addf %122, %123 : vector<8x32xf32>
    %cst_54 = arith.constant 5.000000e-01 : f32
    %125 = vector.broadcast %cst_54 : f32 to vector<8x32xf32>
    %126 = arith.mulf %125, %124 : vector<8x32xf32>
    %127 = vector.extract_strided_slice %121 {offsets = [0, 32], sizes = [8, 32], strides = [1, 1]} : vector<8x128xf32> to vector<8x32xf32>
    %cst_55 = arith.constant 1.000000e+00 : f32
    %128 = vector.broadcast %cst_55 : f32 to vector<8x32xf32>
    %129 = arith.addf %127, %128 : vector<8x32xf32>
    %cst_56 = arith.constant 5.000000e-01 : f32
    %130 = vector.broadcast %cst_56 : f32 to vector<8x32xf32>
    %131 = arith.mulf %130, %129 : vector<8x32xf32>
    %132 = vector.extract_strided_slice %121 {offsets = [0, 64], sizes = [8, 32], strides = [1, 1]} : vector<8x128xf32> to vector<8x32xf32>
    %cst_57 = arith.constant 1.000000e+00 : f32
    %133 = vector.broadcast %cst_57 : f32 to vector<8x32xf32>
    %134 = arith.addf %132, %133 : vector<8x32xf32>
    %cst_58 = arith.constant 5.000000e-01 : f32
    %135 = vector.broadcast %cst_58 : f32 to vector<8x32xf32>
    %136 = arith.mulf %135, %134 : vector<8x32xf32>
    %137 = vector.extract_strided_slice %121 {offsets = [0, 96], sizes = [8, 32], strides = [1, 1]} : vector<8x128xf32> to vector<8x32xf32>
    %138 = arith.mulf %131, %108 : vector<8x32xf32>
    %139 = arith.mulf %126, %137 : vector<8x32xf32>
    %140 = arith.addf %138, %139 : vector<8x32xf32>
    %141 = math.tanh %140 : vector<8x32xf32>
    %142 = arith.mulf %136, %141 : vector<8x32xf32>
    %143 = arith.index_cast %114 : i32 to index
    %c0_59 = arith.constant 0 : index
    %144 = vector.load %arg13[%143, %c0_59] : memref<64x32xf32, #tpu.memory_space<vmem>>, vector<8x32xf32>
    tpu.vector_store %arg13[%143, %c0_59], %142 {strides = array<i32>} : memref<64x32xf32, #tpu.memory_space<vmem>>, vector<8x32xf32>,
    %c4_i32 = arith.constant 4 : i32
    %c8_i32_60 = arith.constant 8 : i32
    %145 = arith.muli %c4_i32, %c8_i32_60 : i32
    %146 = tpu.assume_multiple %145, 8 : i32
    %147 = arith.index_cast %146 : i32 to index
    %c0_61 = arith.constant 0 : index
    %148 = vector.load %arg12[%147, %c0_61] : memref<64x128xf32, #tpu.memory_space<vmem>>, vector<8x128xf32>
    %c0_62 = arith.constant 0 : index
    %c0_63 = arith.constant 0 : index
    %149 = vector.load %arg3[%c0_62, %c0_63] : memref<32x128xf32, #tpu.memory_space<vmem>>, vector<32x128xf32>
    %cst_64 = arith.constant dense<0.000000e+00> : vector<8x128xf32>
    %150 = tpu.matmul %142, %149, %cst_64 {dimension_numbers = #tpu.dot_dimension_numbers<[1], [0], [0], [1], [0, 0, 1, 1], [], []>} : vector<8x32xf32>, vector<32x128xf32>, vector<8x128xf32> -> vector<8x128xf32>
    %151 = arith.addf %148, %150 : vector<8x128xf32>
    %152 = arith.mulf %151, %14 : vector<8x128xf32>
    %153 = math.tanh %152 : vector<8x128xf32>
    %154 = vector.extract_strided_slice %153 {offsets = [0, 0], sizes = [8, 32], strides = [1, 1]} : vector<8x128xf32> to vector<8x32xf32>
    %cst_65 = arith.constant 1.000000e+00 : f32
    %155 = vector.broadcast %cst_65 : f32 to vector<8x32xf32>
    %156 = arith.addf %154, %155 : vector<8x32xf32>
    %cst_66 = arith.constant 5.000000e-01 : f32
    %157 = vector.broadcast %cst_66 : f32 to vector<8x32xf32>
    %158 = arith.mulf %157, %156 : vector<8x32xf32>
    %159 = vector.extract_strided_slice %153 {offsets = [0, 32], sizes = [8, 32], strides = [1, 1]} : vector<8x128xf32> to vector<8x32xf32>
    %cst_67 = arith.constant 1.000000e+00 : f32
    %160 = vector.broadcast %cst_67 : f32 to vector<8x32xf32>
    %161 = arith.addf %159, %160 : vector<8x32xf32>
    %cst_68 = arith.constant 5.000000e-01 : f32
    %162 = vector.broadcast %cst_68 : f32 to vector<8x32xf32>
    %163 = arith.mulf %162, %161 : vector<8x32xf32>
    %164 = vector.extract_strided_slice %153 {offsets = [0, 64], sizes = [8, 32], strides = [1, 1]} : vector<8x128xf32> to vector<8x32xf32>
    %cst_69 = arith.constant 1.000000e+00 : f32
    %165 = vector.broadcast %cst_69 : f32 to vector<8x32xf32>
    %166 = arith.addf %164, %165 : vector<8x32xf32>
    %cst_70 = arith.constant 5.000000e-01 : f32
    %167 = vector.broadcast %cst_70 : f32 to vector<8x32xf32>
    %168 = arith.mulf %167, %166 : vector<8x32xf32>
    %169 = vector.extract_strided_slice %153 {offsets = [0, 96], sizes = [8, 32], strides = [1, 1]} : vector<8x128xf32> to vector<8x32xf32>
    %170 = arith.mulf %163, %140 : vector<8x32xf32>
    %171 = arith.mulf %158, %169 : vector<8x32xf32>
    %172 = arith.addf %170, %171 : vector<8x32xf32>
    %173 = math.tanh %172 : vector<8x32xf32>
    %174 = arith.mulf %168, %173 : vector<8x32xf32>
    %175 = arith.index_cast %146 : i32 to index
    %c0_71 = arith.constant 0 : index
    %176 = vector.load %arg13[%175, %c0_71] : memref<64x32xf32, #tpu.memory_space<vmem>>, vector<8x32xf32>
    tpu.vector_store %arg13[%175, %c0_71], %174 {strides = array<i32>} : memref<64x32xf32, #tpu.memory_space<vmem>>, vector<8x32xf32>,
    %c5_i32 = arith.constant 5 : i32
    %c8_i32_72 = arith.constant 8 : i32
    %177 = arith.muli %c5_i32, %c8_i32_72 : i32
    %178 = tpu.assume_multiple %177, 8 : i32
    %179 = arith.index_cast %178 : i32 to index
    %c0_73 = arith.constant 0 : index
    %180 = vector.load %arg12[%179, %c0_73] : memref<64x128xf32, #tpu.memory_space<vmem>>, vector<8x128xf32>
    %c0_74 = arith.constant 0 : index
    %c0_75 = arith.constant 0 : index
    %181 = vector.load %arg3[%c0_74, %c0_75] : memref<32x128xf32, #tpu.memory_space<vmem>>, vector<32x128xf32>
    %cst_76 = arith.constant dense<0.000000e+00> : vector<8x128xf32>
    %182 = tpu.matmul %174, %181, %cst_76 {dimension_numbers = #tpu.dot_dimension_numbers<[1], [0], [0], [1], [0, 0, 1, 1], [], []>} : vector<8x32xf32>, vector<32x128xf32>, vector<8x128xf32> -> vector<8x128xf32>
    %183 = arith.addf %180, %182 : vector<8x128xf32>
    %184 = arith.mulf %183, %14 : vector<8x128xf32>
    %185 = math.tanh %184 : vector<8x128xf32>
    %186 = vector.extract_strided_slice %185 {offsets = [0, 0], sizes = [8, 32], strides = [1, 1]} : vector<8x128xf32> to vector<8x32xf32>
    %cst_77 = arith.constant 1.000000e+00 : f32
    %187 = vector.broadcast %cst_77 : f32 to vector<8x32xf32>
    %188 = arith.addf %186, %187 : vector<8x32xf32>
    %cst_78 = arith.constant 5.000000e-01 : f32
    %189 = vector.broadcast %cst_78 : f32 to vector<8x32xf32>
    %190 = arith.mulf %189, %188 : vector<8x32xf32>
    %191 = vector.extract_strided_slice %185 {offsets = [0, 32], sizes = [8, 32], strides = [1, 1]} : vector<8x128xf32> to vector<8x32xf32>
    %cst_79 = arith.constant 1.000000e+00 : f32
    %192 = vector.broadcast %cst_79 : f32 to vector<8x32xf32>
    %193 = arith.addf %191, %192 : vector<8x32xf32>
    %cst_80 = arith.constant 5.000000e-01 : f32
    %194 = vector.broadcast %cst_80 : f32 to vector<8x32xf32>
    %195 = arith.mulf %194, %193 : vector<8x32xf32>
    %196 = vector.extract_strided_slice %185 {offsets = [0, 64], sizes = [8, 32], strides = [1, 1]} : vector<8x128xf32> to vector<8x32xf32>
    %cst_81 = arith.constant 1.000000e+00 : f32
    %197 = vector.broadcast %cst_81 : f32 to vector<8x32xf32>
    %198 = arith.addf %196, %197 : vector<8x32xf32>
    %cst_82 = arith.constant 5.000000e-01 : f32
    %199 = vector.broadcast %cst_82 : f32 to vector<8x32xf32>
    %200 = arith.mulf %199, %198 : vector<8x32xf32>
    %201 = vector.extract_strided_slice %185 {offsets = [0, 96], sizes = [8, 32], strides = [1, 1]} : vector<8x128xf32> to vector<8x32xf32>
    %202 = arith.mulf %195, %172 : vector<8x32xf32>
    %203 = arith.mulf %190, %201 : vector<8x32xf32>
    %204 = arith.addf %202, %203 : vector<8x32xf32>
    %205 = math.tanh %204 : vector<8x32xf32>
    %206 = arith.mulf %200, %205 : vector<8x32xf32>
    %207 = arith.index_cast %178 : i32 to index
    %c0_83 = arith.constant 0 : index
    %208 = vector.load %arg13[%207, %c0_83] : memref<64x32xf32, #tpu.memory_space<vmem>>, vector<8x32xf32>
    tpu.vector_store %arg13[%207, %c0_83], %206 {strides = array<i32>} : memref<64x32xf32, #tpu.memory_space<vmem>>, vector<8x32xf32>,
    %c6_i32 = arith.constant 6 : i32
    %c8_i32_84 = arith.constant 8 : i32
    %209 = arith.muli %c6_i32, %c8_i32_84 : i32
    %210 = tpu.assume_multiple %209, 8 : i32
    %211 = arith.index_cast %210 : i32 to index
    %c0_85 = arith.constant 0 : index
    %212 = vector.load %arg12[%211, %c0_85] : memref<64x128xf32, #tpu.memory_space<vmem>>, vector<8x128xf32>
    %c0_86 = arith.constant 0 : index
    %c0_87 = arith.constant 0 : index
    %213 = vector.load %arg3[%c0_86, %c0_87] : memref<32x128xf32, #tpu.memory_space<vmem>>, vector<32x128xf32>
    %cst_88 = arith.constant dense<0.000000e+00> : vector<8x128xf32>
    %214 = tpu.matmul %206, %213, %cst_88 {dimension_numbers = #tpu.dot_dimension_numbers<[1], [0], [0], [1], [0, 0, 1, 1], [], []>} : vector<8x32xf32>, vector<32x128xf32>, vector<8x128xf32> -> vector<8x128xf32>
    %215 = arith.addf %212, %214 : vector<8x128xf32>
    %216 = arith.mulf %215, %14 : vector<8x128xf32>
    %217 = math.tanh %216 : vector<8x128xf32>
    %218 = vector.extract_strided_slice %217 {offsets = [0, 0], sizes = [8, 32], strides = [1, 1]} : vector<8x128xf32> to vector<8x32xf32>
    %cst_89 = arith.constant 1.000000e+00 : f32
    %219 = vector.broadcast %cst_89 : f32 to vector<8x32xf32>
    %220 = arith.addf %218, %219 : vector<8x32xf32>
    %cst_90 = arith.constant 5.000000e-01 : f32
    %221 = vector.broadcast %cst_90 : f32 to vector<8x32xf32>
    %222 = arith.mulf %221, %220 : vector<8x32xf32>
    %223 = vector.extract_strided_slice %217 {offsets = [0, 32], sizes = [8, 32], strides = [1, 1]} : vector<8x128xf32> to vector<8x32xf32>
    %cst_91 = arith.constant 1.000000e+00 : f32
    %224 = vector.broadcast %cst_91 : f32 to vector<8x32xf32>
    %225 = arith.addf %223, %224 : vector<8x32xf32>
    %cst_92 = arith.constant 5.000000e-01 : f32
    %226 = vector.broadcast %cst_92 : f32 to vector<8x32xf32>
    %227 = arith.mulf %226, %225 : vector<8x32xf32>
    %228 = vector.extract_strided_slice %217 {offsets = [0, 64], sizes = [8, 32], strides = [1, 1]} : vector<8x128xf32> to vector<8x32xf32>
    %cst_93 = arith.constant 1.000000e+00 : f32
    %229 = vector.broadcast %cst_93 : f32 to vector<8x32xf32>
    %230 = arith.addf %228, %229 : vector<8x32xf32>
    %cst_94 = arith.constant 5.000000e-01 : f32
    %231 = vector.broadcast %cst_94 : f32 to vector<8x32xf32>
    %232 = arith.mulf %231, %230 : vector<8x32xf32>
    %233 = vector.extract_strided_slice %217 {offsets = [0, 96], sizes = [8, 32], strides = [1, 1]} : vector<8x128xf32> to vector<8x32xf32>
    %234 = arith.mulf %227, %204 : vector<8x32xf32>
    %235 = arith.mulf %222, %233 : vector<8x32xf32>
    %236 = arith.addf %234, %235 : vector<8x32xf32>
    %237 = math.tanh %236 : vector<8x32xf32>
    %238 = arith.mulf %232, %237 : vector<8x32xf32>
    %239 = arith.index_cast %210 : i32 to index
    %c0_95 = arith.constant 0 : index
    %240 = vector.load %arg13[%239, %c0_95] : memref<64x32xf32, #tpu.memory_space<vmem>>, vector<8x32xf32>
    tpu.vector_store %arg13[%239, %c0_95], %238 {strides = array<i32>} : memref<64x32xf32, #tpu.memory_space<vmem>>, vector<8x32xf32>,
    %c7_i32 = arith.constant 7 : i32
    %c8_i32_96 = arith.constant 8 : i32
    %241 = arith.muli %c7_i32, %c8_i32_96 : i32
    %242 = tpu.assume_multiple %241, 8 : i32
    %243 = arith.index_cast %242 : i32 to index
    %c0_97 = arith.constant 0 : index
    %244 = vector.load %arg12[%243, %c0_97] : memref<64x128xf32, #tpu.memory_space<vmem>>, vector<8x128xf32>
    %c0_98 = arith.constant 0 : index
    %c0_99 = arith.constant 0 : index
    %245 = vector.load %arg3[%c0_98, %c0_99] : memref<32x128xf32, #tpu.memory_space<vmem>>, vector<32x128xf32>
    %cst_100 = arith.constant dense<0.000000e+00> : vector<8x128xf32>
    %246 = tpu.matmul %238, %245, %cst_100 {dimension_numbers = #tpu.dot_dimension_numbers<[1], [0], [0], [1], [0, 0, 1, 1], [], []>} : vector<8x32xf32>, vector<32x128xf32>, vector<8x128xf32> -> vector<8x128xf32>
    %247 = arith.addf %244, %246 : vector<8x128xf32>
    %248 = arith.mulf %247, %14 : vector<8x128xf32>
    %249 = math.tanh %248 : vector<8x128xf32>
    %250 = vector.extract_strided_slice %249 {offsets = [0, 0], sizes = [8, 32], strides = [1, 1]} : vector<8x128xf32> to vector<8x32xf32>
    %cst_101 = arith.constant 1.000000e+00 : f32
    %251 = vector.broadcast %cst_101 : f32 to vector<8x32xf32>
    %252 = arith.addf %250, %251 : vector<8x32xf32>
    %cst_102 = arith.constant 5.000000e-01 : f32
    %253 = vector.broadcast %cst_102 : f32 to vector<8x32xf32>
    %254 = arith.mulf %253, %252 : vector<8x32xf32>
    %255 = vector.extract_strided_slice %249 {offsets = [0, 32], sizes = [8, 32], strides = [1, 1]} : vector<8x128xf32> to vector<8x32xf32>
    %cst_103 = arith.constant 1.000000e+00 : f32
    %256 = vector.broadcast %cst_103 : f32 to vector<8x32xf32>
    %257 = arith.addf %255, %256 : vector<8x32xf32>
    %cst_104 = arith.constant 5.000000e-01 : f32
    %258 = vector.broadcast %cst_104 : f32 to vector<8x32xf32>
    %259 = arith.mulf %258, %257 : vector<8x32xf32>
    %260 = vector.extract_strided_slice %249 {offsets = [0, 64], sizes = [8, 32], strides = [1, 1]} : vector<8x128xf32> to vector<8x32xf32>
    %cst_105 = arith.constant 1.000000e+00 : f32
    %261 = vector.broadcast %cst_105 : f32 to vector<8x32xf32>
    %262 = arith.addf %260, %261 : vector<8x32xf32>
    %cst_106 = arith.constant 5.000000e-01 : f32
    %263 = vector.broadcast %cst_106 : f32 to vector<8x32xf32>
    %264 = arith.mulf %263, %262 : vector<8x32xf32>
    %265 = vector.extract_strided_slice %249 {offsets = [0, 96], sizes = [8, 32], strides = [1, 1]} : vector<8x128xf32> to vector<8x32xf32>
    %266 = arith.mulf %259, %236 : vector<8x32xf32>
    %267 = arith.mulf %254, %265 : vector<8x32xf32>
    %268 = arith.addf %266, %267 : vector<8x32xf32>
    %269 = math.tanh %268 : vector<8x32xf32>
    %270 = arith.mulf %264, %269 : vector<8x32xf32>
    %271 = arith.index_cast %242 : i32 to index
    %c0_107 = arith.constant 0 : index
    %272 = vector.load %arg13[%271, %c0_107] : memref<64x32xf32, #tpu.memory_space<vmem>>, vector<8x32xf32>
    tpu.vector_store %arg13[%271, %c0_107], %270 {strides = array<i32>} : memref<64x32xf32, #tpu.memory_space<vmem>>, vector<8x32xf32>,
    %c8_i32_108 = arith.constant 8 : i32
    %c0_109 = arith.constant 0 : index
    %c0_110 = arith.constant 0 : index
    %273 = vector.load %arg10[%c0_109, %c0_110] : memref<8x32xf32, #tpu.memory_space<vmem>>, vector<8x32xf32>
    tpu.vector_store %arg10[%c0_109, %c0_110], %270 {strides = array<i32>} : memref<8x32xf32, #tpu.memory_space<vmem>>, vector<8x32xf32>,
    %c0_111 = arith.constant 0 : index
    %c0_112 = arith.constant 0 : index
    %274 = vector.load %arg11[%c0_111, %c0_112] : memref<8x32xf32, #tpu.memory_space<vmem>>, vector<8x32xf32>
    tpu.vector_store %arg11[%c0_111, %c0_112], %268 {strides = array<i32>} : memref<8x32xf32, #tpu.memory_space<vmem>>, vector<8x32xf32>,
    %c0_113 = arith.constant 0 : index
    %c0_114 = arith.constant 0 : index
    %275 = vector.load %arg13[%c0_113, %c0_114] : memref<64x32xf32, #tpu.memory_space<vmem>>, vector<64x32xf32>
    %c0_115 = arith.constant 0 : index
    %c0_116 = arith.constant 0 : index
    %276 = vector.load %arg5[%c0_115, %c0_116] : memref<32x128xf32, #tpu.memory_space<vmem>>, vector<32x128xf32>
    %cst_117 = arith.constant dense<0.000000e+00> : vector<64x128xf32>
    %277 = tpu.matmul %275, %276, %cst_117 {dimension_numbers = #tpu.dot_dimension_numbers<[1], [0], [0], [1], [0, 0, 1, 1], [], []>} : vector<64x32xf32>, vector<32x128xf32>, vector<64x128xf32> -> vector<64x128xf32>
    %c0_118 = arith.constant 0 : index
    %c0_119 = arith.constant 0 : index
    %278 = vector.load %arg6[%c0_118, %c0_119] : memref<1x128xf32, #tpu.memory_space<vmem>>, vector<1x128xf32>
    %279 = vector.broadcast %278 : vector<1x128xf32> to vector<64x128xf32>
    %280 = arith.addf %277, %279 : vector<64x128xf32>
    %c0_120 = arith.constant 0 : index
    %c0_121 = arith.constant 0 : index
    %281 = vector.load %arg9[%c0_120, %c0_121] : memref<64x128xf32, #tpu.memory_space<vmem>>, vector<64x128xf32>
    tpu.vector_store %arg9[%c0_120, %c0_121], %280 {strides = array<i32>} : memref<64x128xf32, #tpu.memory_space<vmem>>, vector<64x128xf32>,
    return
  }
  func.func @transform_0(%arg0: i32) -> (i32, i32) {
    %c0_i32 = arith.constant 0 : i32
    %c0_i32_0 = arith.constant 0 : i32
    %c0_i32_1 = arith.constant 0 : i32
    return %c0_i32, %c0_i32_0 : i32, i32
  }
  func.func @transform_1(%arg0: i32) -> (i32, i32) {
    %c0_i32 = arith.constant 0 : i32
    %c0_i32_0 = arith.constant 0 : i32
    %c0_i32_1 = arith.constant 0 : i32
    return %c0_i32, %c0_i32_0 : i32, i32
  }
  func.func @transform_2(%arg0: i32) -> (i32, i32) {
    %c0_i32 = arith.constant 0 : i32
    %c0_i32_0 = arith.constant 0 : i32
    %c0_i32_1 = arith.constant 0 : i32
    return %c0_i32, %c0_i32_0 : i32, i32
  }
  func.func @transform_3(%arg0: i32) -> (i32, i32) {
    %c0_i32 = arith.constant 0 : i32
    %c0_i32_0 = arith.constant 0 : i32
    %c0_i32_1 = arith.constant 0 : i32
    return %c0_i32, %c0_i32_0 : i32, i32
  }
  func.func @transform_4(%arg0: i32) -> (i32, i32) {
    %c0_i32 = arith.constant 0 : i32
    %c0_i32_0 = arith.constant 0 : i32
    %c0_i32_1 = arith.constant 0 : i32
    return %c0_i32, %c0_i32_0 : i32, i32
  }
  func.func @transform_5(%arg0: i32) -> (i32, i32) {
    %c0_i32 = arith.constant 0 : i32
    %c0_i32_0 = arith.constant 0 : i32
    %c0_i32_1 = arith.constant 0 : i32
    return %c0_i32, %c0_i32_0 : i32, i32
  }
  func.func @transform_6(%arg0: i32) -> (i32, i32) {
    %c0_i32 = arith.constant 0 : i32
    %c0_i32_0 = arith.constant 0 : i32
    %c0_i32_1 = arith.constant 0 : i32
    return %c0_i32, %c0_i32_0 : i32, i32
  }
  func.func @transform_7(%arg0: i32) -> (i32, i32) {
    %c0_i32 = arith.constant 0 : i32
    %c0_i32_0 = arith.constant 0 : i32
    %c0_i32_1 = arith.constant 0 : i32
    return %c0_i32, %c0_i32_0 : i32, i32
  }
  func.func @transform_8(%arg0: i32) -> (i32, i32) {
    %c0_i32 = arith.constant 0 : i32
    %c0_i32_0 = arith.constant 0 : i32
    %c0_i32_1 = arith.constant 0 : i32
    return %c0_i32, %c0_i32_0 : i32, i32
  }
  func.func @transform_9(%arg0: i32) -> (i32, i32) {
    %c0_i32 = arith.constant 0 : i32
    %c0_i32_0 = arith.constant 0 : i32
    %c0_i32_1 = arith.constant 0 : i32
    return %c0_i32, %c0_i32_0 : i32, i32
  }
  func.func @transform_10(%arg0: i32) -> (i32, i32) {
    %c0_i32 = arith.constant 0 : i32
    %c0_i32_0 = arith.constant 0 : i32
    %c0_i32_1 = arith.constant 0 : i32
    return %c0_i32, %c0_i32_0 : i32, i32
  }
}

</mosaic_0001>

<llo_original>
// kernel: tpu_custom_call.1
$region0: #{tpu_custom_call.1}
  #allocation0 [shape = 'u32[]', space=smem, size = 0x4, offset = 0x4, fixed_abs, tag = 'smem constant byte address 0x4 - core index']
  #allocation1 [shape = 'u32[72,128]{1,0:T(1,128)}', space=vmem, size = 0x9000, scoped, tag = 'internal scratch']
  #allocation2 [shape = 'f32[64,128]{1,0:T(8,128)}', space=vmem, size = 0x8000, scoped, tag = 'scratch operand']
  #allocation3 [shape = 'f32[64,32]{1,0:T(8,128)}', space=vmem, size = 0x8000, scoped, tag = 'scratch operand']
  %s0 = inlined_call_operand.vmem [shape: f32[64,16], index: 0, kind: input, shape index: {}]
  %s1 = inlined_call_operand.vmem [shape: f32[16,128], index: 1, kind: input, shape index: {}]
  %s2 = inlined_call_operand.vmem [shape: f32[32,128], index: 2, kind: input, shape index: {}]
  %s3 = inlined_call_operand.vmem [shape: f32[1,128], index: 3, kind: input, shape index: {}]
  %s4 = inlined_call_operand.vmem [shape: f32[32,128], index: 4, kind: input, shape index: {}]
  %s5 = inlined_call_operand.vmem [shape: f32[1,128], index: 5, kind: input, shape index: {}]
  %s6 = inlined_call_operand.hbm [shape: f32[8,32], index: 6, kind: input, shape index: {}]
  %s7 = inlined_call_operand.hbm [shape: f32[8,32], index: 7, kind: input, shape index: {}]
  %s8 = inlined_call_operand.hbm [shape: f32[64,128], index: 8, kind: output, shape index: {0}]
  %s9 = inlined_call_operand.hbm [shape: f32[8,32], index: 9, kind: output, shape index: {1}]
  %s10 = inlined_call_operand.hbm [shape: f32[8,32], index: 10, kind: output, shape index: {2}]
  %11 = xla_tuple %s8, %s9, %s10
  %s12 = sld [smem:[#allocation0]]
  $region66: #{tpu_custom_call.1} parent=0
    _
  %s14 = ssub.s32 1, %s12
  %s15 = scalar_select 0, %s14, %s12
  $region1: #{tpu_custom_call.1} parent=0
    #allocation4 [shape = 'u8[4096]{0}', space=vmem, size = 0x1000, scoped, tag = 'input window, operand 6, single buffered']
    #allocation5 [shape = 's32[1]{0}', space=sflag, size = 0x4, scoped, tag = 'scoped memory for tpu_custom_call.1']
    #allocation6 [shape = 's32[1]{0}', space=sflag, size = 0x4, scoped, tag = 'scoped memory for tpu_custom_call.1']
    #allocation7 [shape = 'u8[4096]{0}', space=vmem, size = 0x1000, scoped, tag = 'input window, operand 7, single buffered']
    #allocation8 [shape = 's32[1]{0}', space=sflag, size = 0x4, scoped, tag = 'scoped memory for tpu_custom_call.1']
    #allocation9 [shape = 'u8[32768]{0}', space=vmem, size = 0x8000, scoped, tag = 'output window, operand 0, single buffered']
    #allocation10 [shape = 'u8[4096]{0}', space=vmem, size = 0x1000, scoped, tag = 'output window, operand 1, single buffered']
    #allocation11 [shape = 's32[1]{0}', space=sflag, size = 0x4, scoped, tag = 'scoped memory for tpu_custom_call.1']
    #allocation12 [shape = 'u8[4096]{0}', space=vmem, size = 0x1000, scoped, tag = 'output window, operand 2, single buffered']
    %16 = vsyncpa [#allocation5], 0
    %17 = vsyncpa [#allocation8], 0
    %18 = vsyncpa [#allocation6], 0
    %19 = vsyncpa [#allocation11], 0
    // Predicated region
    $region2: #{tpu_custom_call.1} parent=1 // pred_check
      _
    $region3: #{tpu_custom_call.1} parent=1 // pred_check_branch
      %21 = sbr.rel (0) target = $region5
    $region4: #{tpu_custom_call.1} parent=1 // pred_region
      _
    $region5: #{tpu_custom_call.1} parent=1 // pred_fallthru
      _
    // Predicated region
    $region6: #{tpu_custom_call.1} parent=1 // pred_check
      _
    $region7: #{tpu_custom_call.1} parent=1 // pred_check_branch
      %23 = sbr.rel (0) target = $region9
    $region8: #{tpu_custom_call.1} parent=1 // pred_region
      _
    $region9: #{tpu_custom_call.1} parent=1 // pred_fallthru
      _
    // Predicated region
    $region10: #{tpu_custom_call.1} parent=1 // pred_check
      _
    $region11: #{tpu_custom_call.1} parent=1 // pred_check_branch
      %25 = sbr.rel (0) target = $region13
    $region12: #{tpu_custom_call.1} parent=1 // pred_region
      _
    $region13: #{tpu_custom_call.1} parent=1 // pred_fallthru
      _
    // Predicated region
    $region14: #{tpu_custom_call.1} parent=1 // pred_check
      _
    $region15: #{tpu_custom_call.1} parent=1 // pred_check_branch
      %27 = sbr.rel (0) target = $region17
    $region16: #{tpu_custom_call.1} parent=1 // pred_region
      _
    $region17: #{tpu_custom_call.1} parent=1 // pred_fallthru
      _
    // Predicated region
    $region18: #{tpu_custom_call.1} parent=1 // pred_check
      _
    $region19: #{tpu_custom_call.1} parent=1 // pred_check_branch
      %29 = sbr.rel (0) target = $region21
    $region20: #{tpu_custom_call.1} parent=1 // pred_region
      _
    $region21: #{tpu_custom_call.1} parent=1 // pred_fallthru
      _
    // Predicated region
    $region22: #{tpu_custom_call.1} parent=1 // pred_check
      _
    $region23: #{tpu_custom_call.1} parent=1 // pred_check_branch
      %31 = sbr.rel (0) target = $region25
    $region24: #{tpu_custom_call.1} parent=1 // pred_region
      _
    $region25: #{tpu_custom_call.1} parent=1 // pred_fallthru
      _
    // Predicated region
    $region26: #{tpu_custom_call.1} parent=1 // pred_check
      _
    $region27: #{tpu_custom_call.1} parent=1 // pred_check_branch
      %33 = sbr.rel (0) target = $region29
    $region28: #{tpu_custom_call.1} parent=1 // pred_region
      %35 = vsyncadd [#allocation5], 0
      %s37 = sshll.u32 %s6, 4
      %s38 = int_to_ptr.hbm [resolvable:$true] %s37
      %s39 = sshll.u32 [#allocation4], 4
      %s40 = int_to_ptr.vmem [resolvable:$true] %s39
      %42 = dma.hbm_to_vmem [thread:$0]  %s38, 128, %s40, [#allocation5]
    $region29: #{tpu_custom_call.1} parent=1 // pred_fallthru
      _
    // Predicated region
    $region30: #{tpu_custom_call.1} parent=1 // pred_check
      _
    $region31: #{tpu_custom_call.1} parent=1 // pred_check_branch
      %44 = sbr.rel (0) target = $region33
    $region32: #{tpu_custom_call.1} parent=1 // pred_region
      %46 = vsyncadd [#allocation8], 0
      %s48 = sshll.u32 %s7, 4
      %s49 = int_to_ptr.hbm [resolvable:$true] %s48
      %s50 = sshll.u32 [#allocation7], 4
      %s51 = int_to_ptr.vmem [resolvable:$true] %s50
      %53 = dma.hbm_to_vmem [thread:$0]  %s49, 128, %s51, [#allocation8]
    $region33: #{tpu_custom_call.1} parent=1 // pred_fallthru
      _
    // Predicated region
    $region34: #{tpu_custom_call.1} parent=1 // pred_check
      _
    $region35: #{tpu_custom_call.1} parent=1 // pred_check_branch
      %55 = sbr.rel (0) target = $region37
    $region36: #{tpu_custom_call.1} parent=1 // pred_region
      %57 = dma.done [#allocation5], 128
    $region37: #{tpu_custom_call.1} parent=1 // pred_fallthru
      _
    // Predicated region
    $region38: #{tpu_custom_call.1} parent=1 // pred_check
      _
    $region39: #{tpu_custom_call.1} parent=1 // pred_check_branch
      %59 = sbr.rel (0) target = $region41
    $region40: #{tpu_custom_call.1} parent=1 // pred_region
      %61 = dma.done [#allocation8], 128
    $region41: #{tpu_custom_call.1} parent=1 // pred_fallthru
      _
    %v62 = vld [vmem:[%s0] sm:$0xff]
    %v63 = vld [vmem:[%s0 + $0x8] sm:$0xff]
    %v64 = vld [vmem:[%s0 + $0x10] sm:$0xff]
    %v65 = vld [vmem:[%s0 + $0x18] sm:$0xff]
    %v66 = vld [vmem:[%s0 + $0x20] sm:$0xff]
    %v67 = vld [vmem:[%s0 + $0x28] sm:$0xff]
    %v68 = vld [vmem:[%s0 + $0x30] sm:$0xff]
    %v69 = vld [vmem:[%s0 + $0x38] sm:$0xff]
    %v70 = vld [vmem:[%s1] sm:$0xff]
    %v71 = vld [vmem:[%s1 + $0x8] sm:$0xff]
    %v72 = vld [vmem:[%s3] sm:$0x1]
    %v74 = vperm.slane %v72, 0
    %vm76 = vcmask 130048
    %v78 = vsel %vm76, %v62, 0
    %v81 = vsel %vm76, %v63, 0
    %v84 = vsel %vm76, %v64, 0
    %v87 = vsel %vm76, %v65, 0
    %v90 = vsel %vm76, %v66, 0
    %v93 = vsel %vm76, %v67, 0
    %v96 = vsel %vm76, %v68, 0
    %v99 = vsel %vm76, %v69, 0
    %101 = vmatpush.msra.mxu0 0.0
    %102 = vmatpush.msra.mxu0 0.0
    %103 = vmatpush.msra.mxu0 0.0
    %104 = vmatpush.msra.mxu0 0.0
    %105 = vmatpush.msra.mxu0 0.0
    %106 = vmatpush.msra.mxu0 0.0
    %107 = vmatpush.msra.mxu0 0.0
    %108 = vmatpush.msra.mxu0 0.0
    %109 = vmatpush.msra.mxu0 0.0
    %110 = vmatpush.msra.mxu0 0.0
    %111 = vmatpush.msra.mxu0 0.0
    %112 = vmatpush.msra.mxu0 0.0
    %113 = vmatpush.msra.mxu0 0.0
    %114 = vmatpush.msra.mxu0 0.0
    %115 = vmatpush.msra.mxu0 %v71
    %116 = vmatpush.msra.mxu0 %v70
    %117 = vmatmul.f32.gmra.mxu0 %v78
    %v118 = vpop.f32.mrf.mxu0
    %v119 = vadd.f32 %v74, %v118
    %120 = vmatmul.f32.gmra.mxu0 %v81
    %v121 = vpop.f32.mrf.mxu0
    %v122 = vadd.f32 %v74, %v121
    %123 = vmatmul.f32.gmra.mxu0 %v84
    %v124 = vpop.f32.mrf.mxu0
    %v125 = vadd.f32 %v74, %v124
    %126 = vmatmul.f32.gmra.mxu0 %v87
    %v127 = vpop.f32.mrf.mxu0
    %v128 = vadd.f32 %v74, %v127
    %129 = vmatmul.f32.gmra.mxu0 %v90
    %v130 = vpop.f32.mrf.mxu0
    %v131 = vadd.f32 %v74, %v130
    %132 = vmatmul.f32.gmra.mxu0 %v93
    %v133 = vpop.f32.mrf.mxu0
    %v134 = vadd.f32 %v74, %v133
    %135 = vmatmul.f32.gmra.mxu0 %v96
    %v136 = vpop.f32.mrf.mxu0
    %v137 = vadd.f32 %v74, %v136
    %138 = vmatmul.f32.gmra.mxu0 %v99
    %v139 = vpop.f32.mrf.mxu0
    %v140 = vadd.f32 %v74, %v139
    %141 = vdwg.mxu0
    %142 = vst [vmem:[#allocation2] sm:$0xff] %v119
    %143 = vst [vmem:[#allocation2 + $0x8] sm:$0xff] %v122
    %144 = vst [vmem:[#allocation2 + $0x10] sm:$0xff] %v125
    %145 = vst [vmem:[#allocation2 + $0x18] sm:$0xff] %v128
    %146 = vst [vmem:[#allocation2 + $0x20] sm:$0xff] %v131
    %147 = vst [vmem:[#allocation2 + $0x28] sm:$0xff] %v134
    %148 = vst [vmem:[#allocation2 + $0x30] sm:$0xff] %v137
    %149 = vst [vmem:[#allocation2 + $0x38] sm:$0xff] %v140
    %v150 = vlaneseq
    %v151 = vand.u32 %v150, 127
    %vm152 = vcmp.lt.s32.totalorder %v151, 96
    %v153 = vsel %vm152, 0.5, 1.0
    %v154 = vld [vmem:[#allocation4] sm:$0xff]
    %v155 = vld [vmem:[#allocation7] sm:$0xff]
    %v156 = vld [vmem:[#allocation2] sm:$0xff]
    %v157 = vld [vmem:[%s2] sm:$0xff]
    %v158 = vld [vmem:[%s2 + $0x8] sm:$0xff]
    %v159 = vld [vmem:[%s2 + $0x10] sm:$0xff]
    %v160 = vld [vmem:[%s2 + $0x18] sm:$0xff]
    %vm161 = vcmask 261120
    %v163 = vsel %vm161, %v154, 0
    %165 = vmatpush.msra.mxu0 0.0
    %166 = vmatpush.msra.mxu0 0.0
    %167 = vmatpush.msra.mxu0 0.0
    %168 = vmatpush.msra.mxu0 0.0
    %169 = vmatpush.msra.mxu0 0.0
    %170 = vmatpush.msra.mxu0 0.0
    %171 = vmatpush.msra.mxu0 0.0
    %172 = vmatpush.msra.mxu0 0.0
    %173 = vmatpush.msra.mxu0 0.0
    %174 = vmatpush.msra.mxu0 0.0
    %175 = vmatpush.msra.mxu0 0.0
    %176 = vmatpush.msra.mxu0 0.0
    %177 = vmatpush.msra.mxu0 %v160
    %178 = vmatpush.msra.mxu0 %v159
    %179 = vmatpush.msra.mxu0 %v158
    %180 = vmatpush.msra.mxu0 %v157
    %181 = vmatmul.f32.gmra.mxu0 %v163
    %v182 = vpop.f32.mrf.mxu0
    %v183 = vadd.f32 0.0, %v182
    %184 = vdwg.mxu0
    %v185 = vadd.f32 %v156, %v183
    %v186 = vmul.f32 %v185, %v153
    %v187 = vtanh.pop %v186
    %v188 = vadd.f32 %v187, 1.0
    %v189 = vmul.f32 %v188, 0.5
    %191 = vrot.lane.b32.xlu0 %v155, 32
    %v192 = vpop.permute.xlu0 %191
    %v194 = vmul.f32 %v189, %v192
    %196 = vrot.lane.b32.xlu0 %v187, 32
    %v197 = vpop.permute.xlu0 %196
    %v199 = vmul.f32 %v189, %v197
    %201 = vrot.lane.b32.xlu0 %v199, 32
    %v202 = vpop.permute.xlu0 %201
    %v204 = vadd.f32 %v194, %v202
    %v205 = vtanh.pop %v204
    %207 = vrot.lane.b32.xlu0 %v205, 32
    %v208 = vpop.permute.xlu0 %207
    %v210 = vmul.f32 %v189, %v208
    %212 = vrot.lane.b32.xlu0 %v210, 64
    %v213 = vpop.permute.xlu0 %212
    %215 = vst.msk [vmem:[#allocation3] sm:$0xff] %vm161, %v213
    %s216 = scalar_lea.vmem [#allocation2], 8
    %v217 = vld [vmem:[%s216] sm:$0xff]
    %v218 = vld [vmem:[%s2] sm:$0xff]
    %v219 = vld [vmem:[%s2 + $0x8] sm:$0xff]
    %v220 = vld [vmem:[%s2 + $0x10] sm:$0xff]
    %v221 = vld [vmem:[%s2 + $0x18] sm:$0xff]
    %v222 = vsel %vm161, %v213, 0
    %224 = vmatpush.msra.mxu0 0.0
    %225 = vmatpush.msra.mxu0 0.0
    %226 = vmatpush.msra.mxu0 0.0
    %227 = vmatpush.msra.mxu0 0.0
    %228 = vmatpush.msra.mxu0 0.0
    %229 = vmatpush.msra.mxu0 0.0
    %230 = vmatpush.msra.mxu0 0.0
    %231 = vmatpush.msra.mxu0 0.0
    %232 = vmatpush.msra.mxu0 0.0
    %233 = vmatpush.msra.mxu0 0.0
    %234 = vmatpush.msra.mxu0 0.0
    %235 = vmatpush.msra.mxu0 0.0
    %236 = vmatpush.msra.mxu0 %v221
    %237 = vmatpush.msra.mxu0 %v220
    %238 = vmatpush.msra.mxu0 %v219
    %239 = vmatpush.msra.mxu0 %v218
    %240 = vmatmul.f32.gmra.mxu0 %v222
    %v241 = vpop.f32.mrf.mxu0
    %v242 = vadd.f32 0.0, %v241
    %243 = vdwg.mxu0
    %v244 = vadd.f32 %v217, %v242
    %v245 = vmul.f32 %v244, %v153
    %v246 = vtanh.pop %v245
    %v247 = vadd.f32 %v246, 1.0
    %v248 = vmul.f32 %v247, 0.5
    %v249 = vmul.f32 %v248, %v204
    %251 = vrot.lane.b32.xlu0 %v246, 32
    %v252 = vpop.permute.xlu0 %251
    %v254 = vmul.f32 %v248, %v252
    %256 = vrot.lane.b32.xlu0 %v254, 32
    %v257 = vpop.permute.xlu0 %256
    %v259 = vadd.f32 %v249, %v257
    %v260 = vtanh.pop %v259
    %262 = vrot.lane.b32.xlu0 %v260, 32
    %v263 = vpop.permute.xlu0 %262
    %v265 = vmul.f32 %v248, %v263
    %267 = vrot.lane.b32.xlu0 %v265, 64
    %v268 = vpop.permute.xlu0 %267
    %s270 = scalar_lea.vmem [#allocation3], 8
    %271 = vst.msk [vmem:[%s270] sm:$0xff] %vm161, %v268
    %s272 = scalar_lea.vmem [#allocation2], 16
    %v273 = vld [vmem:[%s272] sm:$0xff]
    %v274 = vld [vmem:[%s2] sm:$0xff]
    %v275 = vld [vmem:[%s2 + $0x8] sm:$0xff]
    %v276 = vld [vmem:[%s2 + $0x10] sm:$0xff]
    %v277 = vld [vmem:[%s2 + $0x18] sm:$0xff]
    %v278 = vsel %vm161, %v268, 0
    %280 = vmatpush.msra.mxu0 0.0
    %281 = vmatpush.msra.mxu0 0.0
    %282 = vmatpush.msra.mxu0 0.0
    %283 = vmatpush.msra.mxu0 0.0
    %284 = vmatpush.msra.mxu0 0.0
    %285 = vmatpush.msra.mxu0 0.0
    %286 = vmatpush.msra.mxu0 0.0
    %287 = vmatpush.msra.mxu0 0.0
    %288 = vmatpush.msra.mxu0 0.0
    %289 = vmatpush.msra.mxu0 0.0
    %290 = vmatpush.msra.mxu0 0.0
    %291 = vmatpush.msra.mxu0 0.0
    %292 = vmatpush.msra.mxu0 %v277
    %293 = vmatpush.msra.mxu0 %v276
    %294 = vmatpush.msra.mxu0 %v275
    %295 = vmatpush.msra.mxu0 %v274
    %296 = vmatmul.f32.gmra.mxu0 %v278
    %v297 = vpop.f32.mrf.mxu0
    %v298 = vadd.f32 0.0, %v297
    %299 = vdwg.mxu0
    %v300 = vadd.f32 %v273, %v298
    %v301 = vmul.f32 %v300, %v153
    %v302 = vtanh.pop %v301
    %v303 = vadd.f32 %v302, 1.0
    %v304 = vmul.f32 %v303, 0.5
    %v305 = vmul.f32 %v304, %v259
    %307 = vrot.lane.b32.xlu0 %v302, 32
    %v308 = vpop.permute.xlu0 %307
    %v310 = vmul.f32 %v304, %v308
    %312 = vrot.lane.b32.xlu0 %v310, 32
    %v313 = vpop.permute.xlu0 %312
    %v315 = vadd.f32 %v305, %v313
    %v316 = vtanh.pop %v315
    %318 = vrot.lane.b32.xlu0 %v316, 32
    %v319 = vpop.permute.xlu0 %318
    %v321 = vmul.f32 %v304, %v319
    %323 = vrot.lane.b32.xlu0 %v321, 64
    %v324 = vpop.permute.xlu0 %323
    %s326 = scalar_lea.vmem [#allocation3], 16
    %327 = vst.msk [vmem:[%s326] sm:$0xff] %vm161, %v324
    %s328 = scalar_lea.vmem [#allocation2], 24
    %v329 = vld [vmem:[%s328] sm:$0xff]
    %v330 = vld [vmem:[%s2] sm:$0xff]
    %v331 = vld [vmem:[%s2 + $0x8] sm:$0xff]
    %v332 = vld [vmem:[%s2 + $0x10] sm:$0xff]
    %v333 = vld [vmem:[%s2 + $0x18] sm:$0xff]
    %v334 = vsel %vm161, %v324, 0
    %336 = vmatpush.msra.mxu0 0.0
    %337 = vmatpush.msra.mxu0 0.0
    %338 = vmatpush.msra.mxu0 0.0
    %339 = vmatpush.msra.mxu0 0.0
    %340 = vmatpush.msra.mxu0 0.0
    %341 = vmatpush.msra.mxu0 0.0
    %342 = vmatpush.msra.mxu0 0.0
    %343 = vmatpush.msra.mxu0 0.0
    %344 = vmatpush.msra.mxu0 0.0
    %345 = vmatpush.msra.mxu0 0.0
    %346 = vmatpush.msra.mxu0 0.0
    %347 = vmatpush.msra.mxu0 0.0
    %348 = vmatpush.msra.mxu0 %v333
    %349 = vmatpush.msra.mxu0 %v332
    %350 = vmatpush.msra.mxu0 %v331
    %351 = vmatpush.msra.mxu0 %v330
    %352 = vmatmul.f32.gmra.mxu0 %v334
    %v353 = vpop.f32.mrf.mxu0
    %v354 = vadd.f32 0.0, %v353
    %355 = vdwg.mxu0
    %v356 = vadd.f32 %v329, %v354
    %v357 = vmul.f32 %v356, %v153
    %v358 = vtanh.pop %v357
    %v359 = vadd.f32 %v358, 1.0
    %v360 = vmul.f32 %v359, 0.5
    %v361 = vmul.f32 %v360, %v315
    %363 = vrot.lane.b32.xlu0 %v358, 32
    %v364 = vpop.permute.xlu0 %363
    %v366 = vmul.f32 %v360, %v364
    %368 = vrot.lane.b32.xlu0 %v366, 32
    %v369 = vpop.permute.xlu0 %368
    %v371 = vadd.f32 %v361, %v369
    %v372 = vtanh.pop %v371
    %374 = vrot.lane.b32.xlu0 %v372, 32
    %v375 = vpop.permute.xlu0 %374
    %v377 = vmul.f32 %v360, %v375
    %379 = vrot.lane.b32.xlu0 %v377, 64
    %v380 = vpop.permute.xlu0 %379
    %s382 = scalar_lea.vmem [#allocation3], 24
    %383 = vst.msk [vmem:[%s382] sm:$0xff] %vm161, %v380
    %s384 = scalar_lea.vmem [#allocation2], 32
    %v385 = vld [vmem:[%s384] sm:$0xff]
    %v386 = vld [vmem:[%s2] sm:$0xff]
    %v387 = vld [vmem:[%s2 + $0x8] sm:$0xff]
    %v388 = vld [vmem:[%s2 + $0x10] sm:$0xff]
    %v389 = vld [vmem:[%s2 + $0x18] sm:$0xff]
    %v390 = vsel %vm161, %v380, 0
    %392 = vmatpush.msra.mxu0 0.0
    %393 = vmatpush.msra.mxu0 0.0
    %394 = vmatpush.msra.mxu0 0.0
    %395 = vmatpush.msra.mxu0 0.0
    %396 = vmatpush.msra.mxu0 0.0
    %397 = vmatpush.msra.mxu0 0.0
    %398 = vmatpush.msra.mxu0 0.0
    %399 = vmatpush.msra.mxu0 0.0
    %400 = vmatpush.msra.mxu0 0.0
    %401 = vmatpush.msra.mxu0 0.0
    %402 = vmatpush.msra.mxu0 0.0
    %403 = vmatpush.msra.mxu0 0.0
    %404 = vmatpush.msra.mxu0 %v389
    %405 = vmatpush.msra.mxu0 %v388
    %406 = vmatpush.msra.mxu0 %v387
    %407 = vmatpush.msra.mxu0 %v386
    %408 = vmatmul.f32.gmra.mxu0 %v390
    %v409 = vpop.f32.mrf.mxu0
    %v410 = vadd.f32 0.0, %v409
    %411 = vdwg.mxu0
    %v412 = vadd.f32 %v385, %v410
    %v413 = vmul.f32 %v412, %v153
    %v414 = vtanh.pop %v413
    %v415 = vadd.f32 %v414, 1.0
    %v416 = vmul.f32 %v415, 0.5
    %v417 = vmul.f32 %v416, %v371
    %419 = vrot.lane.b32.xlu0 %v414, 32
    %v420 = vpop.permute.xlu0 %419
    %v422 = vmul.f32 %v416, %v420
    %424 = vrot.lane.b32.xlu0 %v422, 32
    %v425 = vpop.permute.xlu0 %424
    %v427 = vadd.f32 %v417, %v425
    %v428 = vtanh.pop %v427
    %430 = vrot.lane.b32.xlu0 %v428, 32
    %v431 = vpop.permute.xlu0 %430
    %v433 = vmul.f32 %v416, %v431
    %435 = vrot.lane.b32.xlu0 %v433, 64
    %v436 = vpop.permute.xlu0 %435
    %s438 = scalar_lea.vmem [#allocation3], 32
    %439 = vst.msk [vmem:[%s438] sm:$0xff] %vm161, %v436
    %s440 = scalar_lea.vmem [#allocation2], 40
    %v441 = vld [vmem:[%s440] sm:$0xff]
    %v442 = vld [vmem:[%s2] sm:$0xff]
    %v443 = vld [vmem:[%s2 + $0x8] sm:$0xff]
    %v444 = vld [vmem:[%s2 + $0x10] sm:$0xff]
    %v445 = vld [vmem:[%s2 + $0x18] sm:$0xff]
    %v446 = vsel %vm161, %v436, 0
    %448 = vmatpush.msra.mxu0 0.0
    %449 = vmatpush.msra.mxu0 0.0
    %450 = vmatpush.msra.mxu0 0.0
    %451 = vmatpush.msra.mxu0 0.0
    %452 = vmatpush.msra.mxu0 0.0
    %453 = vmatpush.msra.mxu0 0.0
    %454 = vmatpush.msra.mxu0 0.0
    %455 = vmatpush.msra.mxu0 0.0
    %456 = vmatpush.msra.mxu0 0.0
    %457 = vmatpush.msra.mxu0 0.0
    %458 = vmatpush.msra.mxu0 0.0
    %459 = vmatpush.msra.mxu0 0.0
    %460 = vmatpush.msra.mxu0 %v445
    %461 = vmatpush.msra.mxu0 %v444
    %462 = vmatpush.msra.mxu0 %v443
    %463 = vmatpush.msra.mxu0 %v442
    %464 = vmatmul.f32.gmra.mxu0 %v446
    %v465 = vpop.f32.mrf.mxu0
    %v466 = vadd.f32 0.0, %v465
    %467 = vdwg.mxu0
    %v468 = vadd.f32 %v441, %v466
    %v469 = vmul.f32 %v468, %v153
    %v470 = vtanh.pop %v469
    %v471 = vadd.f32 %v470, 1.0
    %v472 = vmul.f32 %v471, 0.5
    %v473 = vmul.f32 %v472, %v427
    %475 = vrot.lane.b32.xlu0 %v470, 32
    %v476 = vpop.permute.xlu0 %475
    %v478 = vmul.f32 %v472, %v476
    %480 = vrot.lane.b32.xlu0 %v478, 32
    %v481 = vpop.permute.xlu0 %480
    %v483 = vadd.f32 %v473, %v481
    %v484 = vtanh.pop %v483
    %486 = vrot.lane.b32.xlu0 %v484, 32
    %v487 = vpop.permute.xlu0 %486
    %v489 = vmul.f32 %v472, %v487
    %491 = vrot.lane.b32.xlu0 %v489, 64
    %v492 = vpop.permute.xlu0 %491
    %s494 = scalar_lea.vmem [#allocation3], 40
    %495 = vst.msk [vmem:[%s494] sm:$0xff] %vm161, %v492
    %s496 = scalar_lea.vmem [#allocation2], 48
    %v497 = vld [vmem:[%s496] sm:$0xff]
    %v498 = vld [vmem:[%s2] sm:$0xff]
    %v499 = vld [vmem:[%s2 + $0x8] sm:$0xff]
    %v500 = vld [vmem:[%s2 + $0x10] sm:$0xff]
    %v501 = vld [vmem:[%s2 + $0x18] sm:$0xff]
    %v502 = vsel %vm161, %v492, 0
    %504 = vmatpush.msra.mxu0 0.0
    %505 = vmatpush.msra.mxu0 0.0
    %506 = vmatpush.msra.mxu0 0.0
    %507 = vmatpush.msra.mxu0 0.0
    %508 = vmatpush.msra.mxu0 0.0
    %509 = vmatpush.msra.mxu0 0.0
    %510 = vmatpush.msra.mxu0 0.0
    %511 = vmatpush.msra.mxu0 0.0
    %512 = vmatpush.msra.mxu0 0.0
    %513 = vmatpush.msra.mxu0 0.0
    %514 = vmatpush.msra.mxu0 0.0
    %515 = vmatpush.msra.mxu0 0.0
    %516 = vmatpush.msra.mxu0 %v501
    %517 = vmatpush.msra.mxu0 %v500
    %518 = vmatpush.msra.mxu0 %v499
    %519 = vmatpush.msra.mxu0 %v498
    %520 = vmatmul.f32.gmra.mxu0 %v502
    %v521 = vpop.f32.mrf.mxu0
    %v522 = vadd.f32 0.0, %v521
    %523 = vdwg.mxu0
    %v524 = vadd.f32 %v497, %v522
    %v525 = vmul.f32 %v524, %v153
    %v526 = vtanh.pop %v525
    %v527 = vadd.f32 %v526, 1.0
    %v528 = vmul.f32 %v527, 0.5
    %v529 = vmul.f32 %v528, %v483
    %531 = vrot.lane.b32.xlu0 %v526, 32
    %v532 = vpop.permute.xlu0 %531
    %v534 = vmul.f32 %v528, %v532
    %536 = vrot.lane.b32.xlu0 %v534, 32
    %v537 = vpop.permute.xlu0 %536
    %v539 = vadd.f32 %v529, %v537
    %v540 = vtanh.pop %v539
    %542 = vrot.lane.b32.xlu0 %v540, 32
    %v543 = vpop.permute.xlu0 %542
    %v545 = vmul.f32 %v528, %v543
    %547 = vrot.lane.b32.xlu0 %v545, 64
    %v548 = vpop.permute.xlu0 %547
    %s550 = scalar_lea.vmem [#allocation3], 48
    %551 = vst.msk [vmem:[%s550] sm:$0xff] %vm161, %v548
    %s552 = scalar_lea.vmem [#allocation2], 56
    %v553 = vld [vmem:[%s552] sm:$0xff]
    %v554 = vld [vmem:[%s2] sm:$0xff]
    %v555 = vld [vmem:[%s2 + $0x8] sm:$0xff]
    %v556 = vld [vmem:[%s2 + $0x10] sm:$0xff]
    %v557 = vld [vmem:[%s2 + $0x18] sm:$0xff]
    %v558 = vsel %vm161, %v548, 0
    %560 = vmatpush.msra.mxu0 0.0
    %561 = vmatpush.msra.mxu0 0.0
    %562 = vmatpush.msra.mxu0 0.0
    %563 = vmatpush.msra.mxu0 0.0
    %564 = vmatpush.msra.mxu0 0.0
    %565 = vmatpush.msra.mxu0 0.0
    %566 = vmatpush.msra.mxu0 0.0
    %567 = vmatpush.msra.mxu0 0.0
    %568 = vmatpush.msra.mxu0 0.0
    %569 = vmatpush.msra.mxu0 0.0
    %570 = vmatpush.msra.mxu0 0.0
    %571 = vmatpush.msra.mxu0 0.0
    %572 = vmatpush.msra.mxu0 %v557
    %573 = vmatpush.msra.mxu0 %v556
    %574 = vmatpush.msra.mxu0 %v555
    %575 = vmatpush.msra.mxu0 %v554
    %576 = vmatmul.f32.gmra.mxu0 %v558
    %v577 = vpop.f32.mrf.mxu0
    %v578 = vadd.f32 0.0, %v577
    %579 = vdwg.mxu0
    %v580 = vadd.f32 %v553, %v578
    %v581 = vmul.f32 %v580, %v153
    %v582 = vtanh.pop %v581
    %v583 = vadd.f32 %v582, 1.0
    %v584 = vmul.f32 %v583, 0.5
    %v585 = vmul.f32 %v584, %v539
    %587 = vrot.lane.b32.xlu0 %v582, 32
    %v588 = vpop.permute.xlu0 %587
    %v590 = vmul.f32 %v584, %v588
    %592 = vrot.lane.b32.xlu0 %v590, 32
    %v593 = vpop.permute.xlu0 %592
    %v595 = vadd.f32 %v585, %v593
    %v596 = vtanh.pop %v595
    %598 = vrot.lane.b32.xlu0 %v596, 32
    %v599 = vpop.permute.xlu0 %598
    %v601 = vmul.f32 %v584, %v599
    %603 = vrot.lane.b32.xlu0 %v601, 64
    %v604 = vpop.permute.xlu0 %603
    %s606 = scalar_lea.vmem [#allocation3], 56
    %607 = vst.msk [vmem:[%s606] sm:$0xff] %vm161, %v604
    %608 = vst.msk [vmem:[#allocation10] sm:$0xff] %vm161, %v604
    %610 = vrot.lane.b32.xlu0 %v595, 96
    %v611 = vpop.permute.xlu0 %610
    %613 = vst.msk [vmem:[#allocation12] sm:$0xff] %vm161, %v611
    %v614 = vld [vmem:[#allocation3] sm:$0xff]
    %v615 = vld [vmem:[#allocation3 + $0x8] sm:$0xff]
    %v616 = vld [vmem:[#allocation3 + $0x10] sm:$0xff]
    %v617 = vld [vmem:[#allocation3 + $0x18] sm:$0xff]
    %v618 = vld [vmem:[#allocation3 + $0x20] sm:$0xff]
    %v619 = vld [vmem:[#allocation3 + $0x28] sm:$0xff]
    %v620 = vld [vmem:[#allocation3 + $0x30] sm:$0xff]
    %v621 = vld [vmem:[#allocation3 + $0x38] sm:$0xff]
    %v622 = vld [vmem:[%s4] sm:$0xff]
    %v623 = vld [vmem:[%s4 + $0x8] sm:$0xff]
    %v624 = vld [vmem:[%s4 + $0x10] sm:$0xff]
    %v625 = vld [vmem:[%s4 + $0x18] sm:$0xff]
    %v626 = vld [vmem:[%s5] sm:$0x1]
    %v628 = vperm.slane %v626, 0
    %v631 = vsel %vm161, %v614, 0
    %v634 = vsel %vm161, %v615, 0
    %v637 = vsel %vm161, %v616, 0
    %v640 = vsel %vm161, %v617, 0
    %v643 = vsel %vm161, %v618, 0
    %v646 = vsel %vm161, %v619, 0
    %v649 = vsel %vm161, %v620, 0
    %v652 = vsel %vm161, %v621, 0
    %654 = vmatpush.msra.mxu0 0.0
    %655 = vmatpush.msra.mxu0 0.0
    %656 = vmatpush.msra.mxu0 0.0
    %657 = vmatpush.msra.mxu0 0.0
    %658 = vmatpush.msra.mxu0 0.0
    %659 = vmatpush.msra.mxu0 0.0
    %660 = vmatpush.msra.mxu0 0.0
    %661 = vmatpush.msra.mxu0 0.0
    %662 = vmatpush.msra.mxu0 0.0
    %663 = vmatpush.msra.mxu0 0.0
    %664 = vmatpush.msra.mxu0 0.0
    %665 = vmatpush.msra.mxu0 0.0
    %666 = vmatpush.msra.mxu0 %v625
    %667 = vmatpush.msra.mxu0 %v624
    %668 = vmatpush.msra.mxu0 %v623
    %669 = vmatpush.msra.mxu0 %v622
    %670 = vmatmul.f32.gmra.mxu0 %v631
    %v671 = vpop.f32.mrf.mxu0
    %v672 = vadd.f32 %v628, %v671
    %673 = vmatmul.f32.gmra.mxu0 %v634
    %v674 = vpop.f32.mrf.mxu0
    %v675 = vadd.f32 %v628, %v674
    %676 = vmatmul.f32.gmra.mxu0 %v637
    %v677 = vpop.f32.mrf.mxu0
    %v678 = vadd.f32 %v628, %v677
    %679 = vmatmul.f32.gmra.mxu0 %v640
    %v680 = vpop.f32.mrf.mxu0
    %v681 = vadd.f32 %v628, %v680
    %682 = vmatmul.f32.gmra.mxu0 %v643
    %v683 = vpop.f32.mrf.mxu0
    %v684 = vadd.f32 %v628, %v683
    %685 = vmatmul.f32.gmra.mxu0 %v646
    %v686 = vpop.f32.mrf.mxu0
    %v687 = vadd.f32 %v628, %v686
    %688 = vmatmul.f32.gmra.mxu0 %v649
    %v689 = vpop.f32.mrf.mxu0
    %v690 = vadd.f32 %v628, %v689
    %691 = vmatmul.f32.gmra.mxu0 %v652
    %v692 = vpop.f32.mrf.mxu0
    %v693 = vadd.f32 %v628, %v692
    %694 = vdwg.mxu0
    %695 = vst [vmem:[#allocation9] sm:$0xff] %v672
    %696 = vst [vmem:[#allocation9 + $0x8] sm:$0xff] %v675
    %697 = vst [vmem:[#allocation9 + $0x10] sm:$0xff] %v678
    %698 = vst [vmem:[#allocation9 + $0x18] sm:$0xff] %v681
    %699 = vst [vmem:[#allocation9 + $0x20] sm:$0xff] %v684
    %700 = vst [vmem:[#allocation9 + $0x28] sm:$0xff] %v687
    %701 = vst [vmem:[#allocation9 + $0x30] sm:$0xff] %v690
    %702 = vst [vmem:[#allocation9 + $0x38] sm:$0xff] %v693
    // Predicated region
    $region42: #{tpu_custom_call.1} parent=1 // pred_check
      _
    $region43: #{tpu_custom_call.1} parent=1 // pred_check_branch
      %704 = sbr.rel (0) target = $region45
    $region44: #{tpu_custom_call.1} parent=1 // pred_region
      %706 = vsyncadd [#allocation6], 0
      %s707 = sshll.u32 [#allocation9], 4
      %s708 = int_to_ptr.vmem [resolvable:$true] %s707
      %s709 = sshll.u32 %s8, 4
      %s710 = int_to_ptr.hbm [resolvable:$true] %s709
      %715 = dma.vmem_to_hbm [thread:$0]  %s708, 1024, %s710, [#allocation6], 128, 128, 8
    $region45: #{tpu_custom_call.1} parent=1 // pred_fallthru
      _
    // Predicated region
    $region46: #{tpu_custom_call.1} parent=1 // pred_check
      _
    $region47: #{tpu_custom_call.1} parent=1 // pred_check_branch
      %717 = sbr.rel (0) target = $region49
    $region48: #{tpu_custom_call.1} parent=1 // pred_region
      %719 = vsyncadd [#allocation11], 0
      %s721 = sshll.u32 [#allocation10], 4
      %s722 = int_to_ptr.vmem [resolvable:$true] %s721
      %s723 = sshll.u32 %s9, 4
      %s724 = int_to_ptr.hbm [resolvable:$true] %s723
      %726 = dma.vmem_to_hbm [thread:$0]  %s722, 128, %s724, [#allocation11]
    $region49: #{tpu_custom_call.1} parent=1 // pred_fallthru
      _
    // Predicated region
    $region50: #{tpu_custom_call.1} parent=1 // pred_check
      _
    $region51: #{tpu_custom_call.1} parent=1 // pred_check_branch
      %728 = sbr.rel (0) target = $region53
    $region52: #{tpu_custom_call.1} parent=1 // pred_region
      %730 = vsyncadd [#allocation11], 0
      %s732 = sshll.u32 [#allocation12], 4
      %s733 = int_to_ptr.vmem [resolvable:$true] %s732
      %s734 = sshll.u32 %s10, 4
      %s735 = int_to_ptr.hbm [resolvable:$true] %s734
      %737 = dma.vmem_to_hbm [thread:$0]  %s733, 128, %s735, [#allocation11]
    $region53: #{tpu_custom_call.1} parent=1 // pred_fallthru
      _
    // Predicated region
    $region54: #{tpu_custom_call.1} parent=1 // pred_check
      _
    $region55: #{tpu_custom_call.1} parent=1 // pred_check_branch
      %739 = sbr.rel (0) target = $region57
    $region56: #{tpu_custom_call.1} parent=1 // pred_region
      %741 = dma.done [#allocation6], 1024
    $region57: #{tpu_custom_call.1} parent=1 // pred_fallthru
      _
    // Predicated region
    $region58: #{tpu_custom_call.1} parent=1 // pred_check
      _
    $region59: #{tpu_custom_call.1} parent=1 // pred_check_branch
      %743 = sbr.rel (0) target = $region61
    $region60: #{tpu_custom_call.1} parent=1 // pred_region
      %745 = dma.done [#allocation11], 128
    $region61: #{tpu_custom_call.1} parent=1 // pred_fallthru
      _
    // Predicated region
    $region62: #{tpu_custom_call.1} parent=1 // pred_check
      _
    $region63: #{tpu_custom_call.1} parent=1 // pred_check_branch
      %747 = sbr.rel (0) target = $region65
    $region64: #{tpu_custom_call.1} parent=1 // pred_region
      %749 = dma.done [#allocation11], 128
    $region65: #{tpu_custom_call.1} parent=1 // pred_fallthru
      _
    %750 = vsyncpa [#allocation5], 1
    %751 = vsyncpa [#allocation8], 1
    %752 = vsyncpa [#allocation6], 1
    %753 = vsyncpa [#allocation11], 1

</llo_original>
